<compile_context>
chip_gen: v6e
topology: v6e:2x2x1
jax: 0.10.0
libtpu: 0.0.40
codegen_flags: <defaults>
</compile_context>

<pallas_src>
import numpy as np
import jax
import jax.numpy as jnp
from jax.experimental import pallas as pl
from jax.experimental.pallas import tpu as pltpu


# --------------------------------- kernels -----------------------------------

def _sigmoid(z):
    # sigmoid(z) == 0.5 * (tanh(z/2) + 1): exact, EUP-routed.
    return 0.5 * (jnp.tanh(0.5 * z) + 1.0)


def _scoring_kernel_whole(x_ref, w_ref, b_ref, o_ref):
    """Small-N gridless path: whole arrays VMEM resident."""
    x = x_ref[...].astype(jnp.float32)
    w = w_ref[...].astype(jnp.float32)
    logits = jnp.sum(x * w, axis=-1, keepdims=True) + b_ref[...]
    o_ref[...] = _sigmoid(logits)


def _scoring_kernel_packed(x_ref, w_ref, b_ref, o_ref):
    """Packed MXU path (128-lane-dense input tiles).

    x_ref: [tr, 128]   `pack` original rows per packed row
    w_ref: [128, pack] block-diagonal folded weight (column j holds w_eff at
                       rows j*d_in : (j+1)*d_in)
    b_ref: [1, 1]      SMEM scalar bias
    o_ref: [tr, pack]  f32; element (i, j) is the score of original row pack*i+j

    Per-output-row dependence is strictly on the matching input row, so ragged
    (masked) tail tiles are safe.  bf16 inputs go straight to the MXU with f32
    accumulation (no upcast pass).
    """
    logits = jnp.dot(x_ref[...], w_ref[...],
                     preferred_element_type=jnp.float32) + b_ref[0, 0]
    o_ref[...] = _sigmoid(logits)


def _scoring_kernel_rows(x_ref, w_ref, b_ref, o_ref):
    """Fallback row-streaming path (d_in does not divide 128).

    x_ref: [tm, d_in]  w_ref: [1, d_in]  b_ref: [1, 1] SMEM  o_ref: [tm, 1]
    VPU broadcast-multiply + XLU lane reduce; upcast in-kernel (v5e: no bf16 VPU).
    """
    x = x_ref[...].astype(jnp.float32)
    w = w_ref[...].astype(jnp.float32)
    logits = jnp.sum(x * w, axis=-1, keepdims=True) + b_ref[0, 0]
    o_ref[...] = _sigmoid(logits)


# -------------------------------- wrappers ------------------------------------

def _round_up(v, m):
    return ((v + m - 1) // m) * m


def _vmem_limit(bytes_needed):
    # Never below the 32 MiB scoped default (v5e's 16 MiB default must not
    # bind); cap at 56 MiB for headroom under v7x's 64 MiB physical VMEM
    # (v5e/v6e have 128 MiB physical, so the cap is safe there too).
    return int(min(max(bytes_needed, 32 << 20), 56 << 20))


def _forward_packed(x, w_eff_row, b_eff, *, pack, tile_rows):
    N, d_in = x.shape
    M = N // pack
    lanes = pack * d_in                                   # == 128
    xp = x.reshape(M, lanes)                              # FREE contiguous reshape

    # Block-diagonal folded weight: kron(I_pack, w_col) -> [128, pack].
    w_bd = jnp.kron(jnp.eye(pack, dtype=jnp.float32),
                    w_eff_row.reshape(d_in, 1)).astype(x.dtype)

    tr = max(8, (tile_rows // pack) // 8 * 8)             # packed rows per step
    if M <= tr:
        # Keep >= 2 grid steps so both v7x TensorCores get balanced work.
        tr = max(8, _round_up((M + 1) // 2, 8))

    grid = (pl.cdiv(M, tr),)                              # ragged tail: NO padding pass

    # double-buffered x tiles + double-buffered lane-padded out tiles + weight
    need = (2 * tr * lanes * x.dtype.itemsize
            + 2 * tr * 128 * 4
            + 2 * lanes * _round_up(pack, 128) * 4
            + (2 << 20))

    out2d = pl.pallas_call(
        _scoring_kernel_packed,
        out_shape=jax.ShapeDtypeStruct((M, pack), jnp.float32),
        grid=grid,
        in_specs=[
            pl.BlockSpec((tr, lanes), lambda i: (i, 0)),        # stream x tiles
            pl.BlockSpec((lanes, pack), lambda i: (0, 0)),      # resident weight
            pl.BlockSpec(memory_space=pltpu.MemorySpace.SMEM),  # scalar bias
        ],
        out_specs=pl.BlockSpec((tr, pack), lambda i: (i, 0)),
        compiler_params=pltpu.CompilerParams(
            dimension_semantics=("parallel",),
            vmem_limit_bytes=_vmem_limit(need)),
    )(xp, w_bd, b_eff)
    return out2d.reshape(N, 1)                            # FREE contiguous reshape


def _forward_rows(x, w_eff_row, b_eff, *, tile_rows):
    N, d_in = x.shape
    tm = max(8, (tile_rows // 8) * 8)
    if N <= tm:
        # Keep >= 2 grid steps so both v7x TensorCores get balanced work.
        tm = max(8, _round_up((N + 1) // 2, 8))

    grid = (pl.cdiv(N, tm),)                              # ragged tail: NO padding pass

    lane_pad = _round_up(d_in, 128)
    need = (2 * tm * lane_pad * x.dtype.itemsize
            + 2 * tm * 128 * 4
            + 2 * 8 * lane_pad * 4
            + (2 << 20))

    return pl.pallas_call(
        _scoring_kernel_rows,
        out_shape=jax.ShapeDtypeStruct((N, 1), jnp.float32),
        grid=grid,
        in_specs=[
            pl.BlockSpec((tm, d_in), lambda i: (i, 0)),         # stream x rows
            pl.BlockSpec((1, d_in), lambda i: (0, 0)),          # resident weight row
            pl.BlockSpec(memory_space=pltpu.MemorySpace.SMEM),  # scalar bias
        ],
        out_specs=pl.BlockSpec((tm, 1), lambda i: (i, 0)),
        compiler_params=pltpu.CompilerParams(
            dimension_semantics=("parallel",),
            vmem_limit_bytes=_vmem_limit(need)),
    )(x, w_eff_row, b_eff)


def mlp_forward(x, w_eff_row, b_eff, *, tile_rows=32768, gridless_rows=1024):
    """scores = sigmoid(x @ w_eff_row.T + b_eff).

    x:         [N, d_in] float32 or bfloat16 (bf16 streaming halves HBM reads)
    w_eff_row: [1, d_in] float32  (folded fc2.weight @ fc1.weight)
    b_eff:     [1, 1]    float32  (folded fc2.weight @ fc1.bias + fc2.bias)
    returns    [N, 1]    float32 scores
    """
    N, d_in = x.shape
    assert w_eff_row.shape == (1, d_in)
    assert b_eff.shape == (1, 1)
    w_eff_row = w_eff_row.astype(jnp.float32)
    b_eff = b_eff.astype(jnp.float32)

    if N <= gridless_rows:
        # Small case: single gridless invocation, whole arrays VMEM resident
        # (no pipeline prologue/epilogue, no double buffering).
        return pl.pallas_call(
            _scoring_kernel_whole,
            out_shape=jax.ShapeDtypeStruct((N, 1), jnp.float32),
        )(x, w_eff_row, b_eff)

    pack = 128 // d_in if (d_in <= 128 and 128 % d_in == 0) else 1
    if pack > 1 and N % pack == 0:
        return _forward_packed(x, w_eff_row, b_eff, pack=pack, tile_rows=tile_rows)
    # d_in does not pack cleanly into 128 lanes: row-streaming fallback.
    return _forward_rows(x, w_eff_row, b_eff, tile_rows=tile_rows)


# --------------------- host-side proportional selection ----------------------

def select_nodes_proportional(scores, cluster_assignment, budget):
    """NumPy reproduction of NodeScoringNN.select_nodes_proportional."""
    scores = np.asarray(scores)                      # [N, 1]
    c = np.asarray(cluster_assignment).astype(np.int64)
    n = scores.shape[0]
    cluster_sizes = np.bincount(c)
    selected = np.zeros_like(scores)
    remaining = int(budget)

    for cluster_idx in range(int(c.max()) + 1):
        cluster_indices = np.nonzero(c == cluster_idx)[0]
        cluster_size = int(cluster_sizes[cluster_idx]) if cluster_idx < len(cluster_sizes) else 0
        nodes_to_select = min(int(round(budget * (cluster_size / n))), remaining)
        if nodes_to_select == 0:
            continue
        cluster_scores = scores[cluster_indices].reshape(-1)
        order = np.argsort(-cluster_scores, kind="stable")       # descending
        selected_indices = cluster_indices[order[:nodes_to_select]]
        selected[selected_indices] = 1
        remaining -= nodes_to_select

    if remaining > 0:
        unselected_indices = np.nonzero(selected.reshape(-1) == 0)[0]
        if unselected_indices.size > 0:
            unselected_scores = scores[unselected_indices].reshape(-1)
            order = np.argsort(-unselected_scores, kind="stable")
            selected[unselected_indices[order[:remaining]]] = 1

    return selected


# ------------------------------ parameter init --------------------------------

def _orthogonal(key, out_dim, in_dim):
    """Deterministic orthogonal init matching nn.init.orthogonal_ semantics."""
    rows, cols = out_dim, in_dim
    transposed = rows < cols
    a = jax.random.normal(key, (max(rows, cols), min(rows, cols)), jnp.float32)
    q, r = jnp.linalg.qr(a)
    q = q * jnp.sign(jnp.diagonal(r))[None, :]
    w = q.T if transposed else q
    return w.astype(jnp.float32)        # [out_dim, in_dim]


# ---------------------------------- main --------------------------------------

if __name__ == "__main__":
    INPUT_DIM, HIDDEN_DIM, OUTPUT_DIM = 32, 64, 1
    NUM_CLUSTERS, BUDGET = 3, 6

    key = jax.random.PRNGKey(0)
    kx, kc, kw1, kb1, kw2, kb2, kx2, kx3 = jax.random.split(key, 8)

    # Parameters matching the PyTorch module's __init__.
    w1 = _orthogonal(kw1, HIDDEN_DIM, INPUT_DIM)          # fc1.weight [H, D_in]
    b1 = (jax.random.uniform(kb1, (HIDDEN_DIM,), jnp.float32) - 0.5) \
         * (2.0 / np.sqrt(INPUT_DIM))
    w2 = _orthogonal(kw2, OUTPUT_DIM, HIDDEN_DIM)         # fc2.weight [1, H]
    b2 = (jax.random.uniform(kb2, (OUTPUT_DIM,), jnp.float32) - 0.5) \
         * (2.0 / np.sqrt(HIDDEN_DIM))

    # Fold fc2∘dropout∘fc1 (dropout identity at eval; forward applies no ReLU).
    w_eff = w2 @ w1                                       # [1, D_in]
    b_eff = (w2 @ b1 + b2).reshape(1, 1)                  # [1, 1]

    def ref_forward(xf):
        return jax.nn.sigmoid((xf @ w1.T + b1) @ w2.T + b2)

    # --- 1) small-N gridless path (module-sized example: N=16 nodes) ---
    N1 = 16
    x1 = jax.random.normal(kx, (N1, INPUT_DIM), jnp.float32)
    c1 = jax.random.randint(kc, (N1,), 0, NUM_CLUSTERS, jnp.int32)
    s1 = jax.block_until_ready(mlp_forward(x1, w_eff, b_eff))
    np.testing.assert_allclose(np.asarray(s1), np.asarray(ref_forward(x1)),
                               rtol=1e-4, atol=1e-5)

    # --- 2) packed MXU path: ragged grid (no pad), bf16 streaming, lane-dense x ---
    N2 = 4000
    x2 = jax.random.normal(kx2, (N2, INPUT_DIM), jnp.float32).astype(jnp.bfloat16)
    s2 = jax.block_until_ready(
        mlp_forward(x2, w_eff, b_eff, tile_rows=1024, gridless_rows=64))
    ref2 = ref_forward(x2.astype(jnp.float32))
    np.testing.assert_allclose(np.asarray(s2), np.asarray(ref2),
                               rtol=2e-2, atol=2e-2)      # bf16 streaming tolerance

    # --- 3) fallback row path (d_in does not divide 128): ragged grid, no pad ---
    N3, D3 = 50, 24
    w1b = _orthogonal(kw1, HIDDEN_DIM, D3)
    w_eff_b = w2 @ w1b
    x3 = jax.random.normal(kx3, (N3, D3), jnp.float32)
    s3 = jax.block_until_ready(
        mlp_forward(x3, w_eff_b, b_eff, tile_rows=16, gridless_rows=8))
    ref3 = jax.nn.sigmoid((x3 @ w1b.T + b1) @ w2.T + b2)
    np.testing.assert_allclose(np.asarray(s3), np.asarray(ref3),
                               rtol=1e-4, atol=1e-5)

    # --- data-dependent proportional selection (host-side glue, exact semantics) ---
    selected = select_nodes_proportional(np.asarray(s1), np.asarray(c1), BUDGET)
    assert selected.shape == (N1, OUTPUT_DIM)
    assert int(selected.sum()) <= BUDGET

    print("KERNEL_OK")
</pallas_src>

<mosaic_0001>
module attributes {stable_mosaic.version = 11 : i64} {
  func.func @_scoring_kernel_whole(%arg0: memref<16x32xf32, #tpu.memory_space<vmem>>, %arg1: memref<1x32xf32, #tpu.memory_space<vmem>>, %arg2: memref<1x1xf32, #tpu.memory_space<vmem>>, %arg3: memref<16x1xf32, #tpu.memory_space<vmem>>) attributes {dimension_semantics = [], scalar_prefetch = 0 : i64, scratch_operands = 0 : i64, tpu.core_type = #tpu.core_type<tc>} {
    %c0 = arith.constant 0 : index
    %c0_0 = arith.constant 0 : index
    %0 = vector.load %arg0[%c0, %c0_0] : memref<16x32xf32, #tpu.memory_space<vmem>>, vector<16x32xf32>
    %c0_1 = arith.constant 0 : index
    %c0_2 = arith.constant 0 : index
    %1 = vector.load %arg1[%c0_1, %c0_2] : memref<1x32xf32, #tpu.memory_space<vmem>>, vector<1x32xf32>
    %2 = vector.broadcast %1 : vector<1x32xf32> to vector<16x32xf32>
    %3 = arith.mulf %0, %2 : vector<16x32xf32>
    %cst = arith.constant dense<0.000000e+00> : vector<16xf32>
    %4 = vector.multi_reduction <add>, %3, %cst [1] : vector<16x32xf32> to vector<16xf32>
    %5 = vector.shape_cast %4 : vector<16xf32> to vector<16x1xf32>
    %c0_3 = arith.constant 0 : index
    %c0_4 = arith.constant 0 : index
    %6 = vector.load %arg2[%c0_3, %c0_4] : memref<1x1xf32, #tpu.memory_space<vmem>>, vector<1x1xf32>
    %7 = vector.broadcast %6 : vector<1x1xf32> to vector<16x1xf32>
    %8 = arith.addf %5, %7 : vector<16x1xf32>
    %cst_5 = arith.constant 5.000000e-01 : f32
    %9 = vector.broadcast %cst_5 : f32 to vector<16x1xf32>
    %10 = arith.mulf %9, %8 : vector<16x1xf32>
    %11 = math.tanh %10 : vector<16x1xf32>
    %cst_6 = arith.constant 1.000000e+00 : f32
    %12 = vector.broadcast %cst_6 : f32 to vector<16x1xf32>
    %13 = arith.addf %11, %12 : vector<16x1xf32>
    %cst_7 = arith.constant 5.000000e-01 : f32
    %14 = vector.broadcast %cst_7 : f32 to vector<16x1xf32>
    %15 = arith.mulf %14, %13 : vector<16x1xf32>
    %c0_8 = arith.constant 0 : index
    %c0_9 = arith.constant 0 : index
    %16 = vector.load %arg3[%c0_8, %c0_9] : memref<16x1xf32, #tpu.memory_space<vmem>>, vector<16x1xf32>
    tpu.vector_store %arg3[%c0_8, %c0_9], %15 {strides = array<i32>} : memref<16x1xf32, #tpu.memory_space<vmem>>, vector<16x1xf32>,
    return
  }
}

</mosaic_0001>

<llo_original>
// kernel: tpu_custom_call.1
$region0: #{tpu_custom_call.1}
  #allocation0 [shape = 'u32[]', space=smem, size = 0x4, offset = 0x4, fixed_abs, tag = 'smem constant byte address 0x4 - core index']
  #allocation1 [shape = 'u32[144,128]{1,0:T(1,128)}', space=vmem, size = 0x12000, scoped, tag = 'internal scratch']
  #allocation2 [shape = 'f32[1,1]{1,0:T(1,128)S(1)}', space=vmem, size = 0x200, scoped, tag = 'scoped memory for tpu_custom_call.1']
  %s0 = inlined_call_operand.hbm [shape: f32[16,32], index: 0, kind: input, shape index: {}]
  %s1 = inlined_call_operand.vmem [shape: f32[1,32], index: 1, kind: input, shape index: {}]
  %s2 = inlined_call_operand.<no memory space> [shape: f32[1,1], index: 2, kind: input, shape index: {}]
  %s3 = inlined_call_operand.vmem [shape: f32[16,1], index: 3, kind: output, shape index: {}]
  %s4 = sld [smem:[#allocation0]]
  $region26: #{tpu_custom_call.1} parent=0
    _
  %s6 = ssub.s32 1, %s4
  %s7 = scalar_select 0, %s6, %s4
  %v8 = vstv %s2
  %9 = vst [vmem:[#allocation2] sm:$0x1] %v8
  $region1: #{tpu_custom_call.1} parent=0
    #allocation3 [shape = 'u8[8192]{0}', space=vmem, size = 0x2000, scoped, tag = 'input window, operand 0, single buffered']
    #allocation4 [shape = 's32[1]{0}', space=sflag, size = 0x4, scoped, tag = 'scoped memory for tpu_custom_call.1']
    %10 = vsyncpa [#allocation4], 0
    // Predicated region
    $region2: #{tpu_custom_call.1} parent=1 // pred_check
      _
    $region3: #{tpu_custom_call.1} parent=1 // pred_check_branch
      %12 = sbr.rel (0) target = $region5
    $region4: #{tpu_custom_call.1} parent=1 // pred_region
      %s14 = ssub.s32 256, 256
      %15 = vsyncadd [#allocation4], %s14
      %s16 = sshll.u32 [#allocation3], 4
      %s17 = int_to_ptr.vmem [resolvable:$true] %s16
      %22 = dma.hbm_to_vmem [thread:$0]  %s0, 256, %s17, [#allocation4], 128, 128, 8
    $region5: #{tpu_custom_call.1} parent=1 // pred_fallthru
      _
    // Predicated region
    $region6: #{tpu_custom_call.1} parent=1 // pred_check
      _
    $region7: #{tpu_custom_call.1} parent=1 // pred_check_branch
      %24 = sbr.rel (0) target = $region9
    $region8: #{tpu_custom_call.1} parent=1 // pred_region
      _
    $region9: #{tpu_custom_call.1} parent=1 // pred_fallthru
      _
    // Predicated region
    $region10: #{tpu_custom_call.1} parent=1 // pred_check
      _
    $region11: #{tpu_custom_call.1} parent=1 // pred_check_branch
      %26 = sbr.rel (0) target = $region13
    $region12: #{tpu_custom_call.1} parent=1 // pred_region
      _
    $region13: #{tpu_custom_call.1} parent=1 // pred_fallthru
      _
    // Predicated region
    $region14: #{tpu_custom_call.1} parent=1 // pred_check
      _
    $region15: #{tpu_custom_call.1} parent=1 // pred_check_branch
      %28 = sbr.rel (0) target = $region17
    $region16: #{tpu_custom_call.1} parent=1 // pred_region
      %29 = dma.done [#allocation4], 256
    $region17: #{tpu_custom_call.1} parent=1 // pred_fallthru
      _
    %v30 = vld [vmem:[#allocation3] sm:$0xff]
    %v31 = vld [vmem:[#allocation3 + $0x8] sm:$0xff]
    %v32 = vld [vmem:[%s1] sm:$0x1]
    %v34 = vlaneseq
    %v35 = vshrl.u32 %v34, 7
    %v36 = vsub.s32 0, %v35
    %v37 = vrot.slane %v32, %v36
    %v39 = vmul.f32 %v30, %v37
    %v40 = vmul.f32 %v31, %v37
    %vm41 = vcmask 261120
    %v42 = vsel %vm41, %v39, 0.0
    %43 = vadd.xlane.f32.xlu0 %v42
    %v44 = vpop.xlane.xlu0 %43
    %v45 = vsel %vm41, %v40, 0.0
    %46 = vadd.xlane.f32.xlu0 %v45
    %v47 = vpop.xlane.xlu0 %46
    %v48 = vld [vmem:[#allocation2] sm:$0x1]
    %v50 = vlaneseq
    %v51 = vshrl.u32 %v50, 7
    %v52 = vsub.s32 0, %v51
    %v53 = vrot.slane %v48, %v52
    %v55 = vadd.f32 %v44, %v53
    %v56 = vadd.f32 %v47, %v53
    %v57 = vmul.f32 %v55, 0.5
    %v58 = vmul.f32 %v56, 0.5
    %v59 = vtanh.pop %v57
    %v60 = vtanh.pop %v58
    %v61 = vadd.f32 %v59, 1.0
    %v62 = vadd.f32 %v60, 1.0
    %v63 = vmul.f32 %v61, 0.5
    %v64 = vmul.f32 %v62, 0.5
    %vm65 = vcmask 7168
    %66 = vst.msk [vmem:[%s3] sm:$0xff] %vm65, %v63
    %67 = vst.msk [vmem:[%s3 + $0x8] sm:$0xff] %vm65, %v64
    // Predicated region
    $region18: #{tpu_custom_call.1} parent=1 // pred_check
      _
    $region19: #{tpu_custom_call.1} parent=1 // pred_check_branch
      %69 = sbr.rel (0) target = $region21
    $region20: #{tpu_custom_call.1} parent=1 // pred_region
      _
    $region21: #{tpu_custom_call.1} parent=1 // pred_fallthru
      _
    // Predicated region
    $region22: #{tpu_custom_call.1} parent=1 // pred_check
      _
    $region23: #{tpu_custom_call.1} parent=1 // pred_check_branch
      %71 = sbr.rel (0) target = $region25
    $region24: #{tpu_custom_call.1} parent=1 // pred_region
      _
    $region25: #{tpu_custom_call.1} parent=1 // pred_fallthru
      _
    %72 = vsyncpa [#allocation4], 1

</llo_original>
